<compile_context>
chip_gen: v6e
topology: v6e:2x2x1
jax: 0.10.0
libtpu: 0.0.40
codegen_flags: <defaults>
</compile_context>

<pallas_src>
import jax
import jax.numpy as jnp
from jax.experimental import pallas as pl
from jax.experimental.pallas import tpu as pltpu

_MIB = 1024 * 1024


def _decode_pma_kernel(x_ref, w_ref, b_ref, o_ref):
    # x_ref: (B, E)   input, resident in VMEM across all grid steps
    # w_ref: (E, TN)  streamed weight tile (bf16), the bandwidth-bound operand
    # b_ref: (1, TN)  streamed f32 bias tile (tn*4 bytes -- noise vs the weight)
    # o_ref: (B, TN)  lane-dense output tile
    acc = jnp.dot(x_ref[...], w_ref[...], preferred_element_type=jnp.float32)
    o_ref[...] = jnp.maximum(acc + b_ref[...], 0.0).astype(o_ref.dtype)


def _vmem_profile():
    """Generation-aware VMEM budgets derived from the chip's VMEM capacity."""
    cap = 128 * _MIB
    try:
        cap = int(pltpu.get_tpu_info().vmem_capacity_bytes)
    except Exception:  # pragma: no cover - conservative fallback off-TPU
        pass
    if cap <= 64 * _MIB:
        # v7x: 64 MiB per TensorCore -> leave headroom for double-buffered
        # output, x, bias tiles and Mosaic internal scratch.
        return dict(vmem_limit=40 * _MIB, weight_budget=22 * _MIB,
                    min_tile_bytes=8 * _MIB)
    # v5e / v6e: 128 MiB physical VMEM.
    return dict(vmem_limit=80 * _MIB, weight_budget=32 * _MIB,
                min_tile_bytes=4 * _MIB)


def _choose_tile_n(n, e, w_bytes, weight_budget, min_tile_bytes):
    """Pick the output-feature tile width.

    Tiny weights -> single full-width block (per-grid-step overhead dominates).
    Otherwise   -> widest multiple-of-128 divisor of N whose double-buffered
                   weight tile fits the budget, keeping >= 2 grid steps so the
                   'parallel' axis can shard across v7x's two TensorCores.
    """
    single_db = 2 * e * n * w_bytes  # double-buffered full-width weight
    if single_db <= weight_budget and e * n * w_bytes <= 2 * min_tile_bytes:
        return n
    if n % 128 != 0:
        # Non-128-multiple N: only a full-extent block is legal on the lane
        # axis; it fits the budget check below or we fail loudly at compile.
        return n
    for tn in range(n - 128, 0, -128):
        if n % tn:
            continue
        if n // tn < 2:
            continue
        if 2 * e * tn * w_bytes > weight_budget:
            continue
        return tn
    return 128  # smallest legal tile; only hit for pathological E


def prepare_decode_pma_params(w, b, compute_dtype=jnp.bfloat16):
    """One-time parameter prep (hoisted out of the hot path).

    w: nn.Linear weight, shape (S*E, E)  ->  returns transposed (E, S*E)
       already in the streaming dtype (bf16 by default).
    b: bias (S*E,)  ->  returns (1, S*E) float32.
    """
    w_t = jnp.asarray(w).T.astype(compute_dtype)
    b2 = jnp.asarray(b).astype(jnp.float32).reshape(1, -1)
    return w_t, b2


def pooling_decode_pma(x, w_t, b2, max_sequences, *, tn=None,
                       out_dtype=jnp.float32):
    """x: (B, E); w_t: (E, S*E) pre-transposed weight in its streaming dtype;
    b2: (1, S*E) f32 bias.  Returns ReLU(x @ w_t + b) viewed as
    (max_sequences, -1), matching the PyTorch module's forward.
    """
    B, E = x.shape
    Ew, N = w_t.shape
    assert Ew == E, (Ew, E)
    assert b2.shape == (1, N), b2.shape

    compute_dtype = w_t.dtype          # weight arrives already in stream dtype
    w_bytes = jnp.dtype(compute_dtype).itemsize

    prof = _vmem_profile()
    if tn is None:
        tn = _choose_tile_n(N, E, w_bytes, prof["weight_budget"],
                            prof["min_tile_bytes"])
    assert N % tn == 0, "output-feature dim must be divisible by the tile size"

    x_c = x.astype(compute_dtype)      # tiny (B, E) cast; negligible traffic

    out = pl.pallas_call(
        _decode_pma_kernel,
        out_shape=jax.ShapeDtypeStruct((B, N), out_dtype),
        grid_spec=pltpu.PrefetchScalarGridSpec(
            num_scalar_prefetch=0,
            grid=(N // tn,),
            in_specs=[
                pl.BlockSpec((B, E), lambda j: (0, 0)),    # x: resident
                pl.BlockSpec((E, tn), lambda j: (0, j)),   # weight tile: streamed
                pl.BlockSpec((1, tn), lambda j: (0, j)),   # bias tile: streamed
            ],
            out_specs=pl.BlockSpec((B, tn), lambda j: (0, j)),
        ),
        compiler_params=pltpu.CompilerParams(
            dimension_semantics=("parallel",),
            vmem_limit_bytes=prof["vmem_limit"],
        ),
    )(x_c, w_t, b2)

    # out.view(max_sequences, -1): row-major reshape of the (B, S*E) result.
    # TODO(synk): for B > 1 this interleaves batch elements exactly like
    # torch's .view on a (B, S*E) tensor; the module is normally used with B=1.
    return out.reshape(max_sequences, -1)


if __name__ == "__main__":
    # Small, forward-consistent shapes.
    max_sequences = 8      # S
    embedding_size = 32    # E  (S*E = 256, a multiple of 128)
    batch = 2              # B

    key = jax.random.PRNGKey(0)
    kx, kw, kb = jax.random.split(key, 3)

    # Deterministic synthetic parameters for nn.Linear(E, S*E).
    # PyTorch stores the weight as (S*E, E).
    w = jax.random.normal(kw, (max_sequences * embedding_size, embedding_size),
                          dtype=jnp.float32) * 0.05
    b = jax.random.normal(kb, (max_sequences * embedding_size,),
                          dtype=jnp.float32) * 0.05
    x = jax.random.normal(kx, (batch, embedding_size), dtype=jnp.float32)

    # One-time parameter prep (weight cast hoisted out of the hot path).
    w_t, b2 = prepare_decode_pma_params(w, b)

    out = pooling_decode_pma(x, w_t, b2, max_sequences)
    out = jax.block_until_ready(out)

    # Pure-JAX reference with the same bf16 operand precision / f32 accumulate.
    # Note: numerics differ from a true f32 torch Linear at bf16-operand level;
    # the loose f32 check below documents that tolerance.
    ref_bf16 = jnp.maximum(
        jnp.dot(x.astype(jnp.bfloat16), w_t,
                preferred_element_type=jnp.float32) + b[None, :],
        0.0,
    ).reshape(max_sequences, -1)
    ref_f32 = jnp.maximum(jnp.dot(x, w.T) + b[None, :], 0.0
                          ).reshape(max_sequences, -1)

    assert out.shape == (max_sequences, batch * embedding_size), out.shape
    assert jnp.allclose(out, ref_bf16, atol=1e-4, rtol=1e-4), float(
        jnp.max(jnp.abs(out - ref_bf16)))
    assert jnp.allclose(out, ref_f32, atol=3e-2, rtol=3e-2), float(
        jnp.max(jnp.abs(out - ref_f32)))

    print("KERNEL_OK")
</pallas_src>

<mosaic_0001>
module attributes {stable_mosaic.version = 11 : i64} {
  func.func @_decode_pma_kernel(%arg0: i32, %arg1: memref<2x32xbf16, #tpu.memory_space<vmem>>, %arg2: memref<32x256xbf16, #tpu.memory_space<vmem>>, %arg3: memref<1x256xf32, #tpu.memory_space<vmem>>, %arg4: memref<2x256xf32, #tpu.memory_space<vmem>>) attributes {dimension_semantics = [#tpu.dimension_semantics<parallel>], iteration_bounds = array<i64: 1>, scalar_prefetch = 0 : i64, scratch_operands = 0 : i64, tpu.core_type = #tpu.core_type<tc>, window_params = [{pipeline_mode = #tpu.pipeline_mode<synchronous>, transform_indices = @transform_0, window_bounds = array<i64: 2, 32>}, {transform_indices = @transform_1, window_bounds = array<i64: 32, 256>}, {transform_indices = @transform_2, window_bounds = array<i64: 1, 256>}, {transform_indices = @transform_3, window_bounds = array<i64: 2, 256>}]} {
    %c0 = arith.constant 0 : index
    %c0_0 = arith.constant 0 : index
    %0 = vector.load %arg1[%c0, %c0_0] : memref<2x32xbf16, #tpu.memory_space<vmem>>, vector<2x32xbf16>
    %c0_1 = arith.constant 0 : index
    %c0_2 = arith.constant 0 : index
    %1 = vector.load %arg2[%c0_1, %c0_2] : memref<32x256xbf16, #tpu.memory_space<vmem>>, vector<32x256xbf16>
    %cst = arith.constant dense<0.000000e+00> : vector<2x256xf32>
    %2 = tpu.matmul %0, %1, %cst {dimension_numbers = #tpu.dot_dimension_numbers<[1], [0], [0], [1], [0, 0, 1, 1], [], []>} : vector<2x32xbf16>, vector<32x256xbf16>, vector<2x256xf32> -> vector<2x256xf32>
    %c0_3 = arith.constant 0 : index
    %c0_4 = arith.constant 0 : index
    %3 = vector.load %arg3[%c0_3, %c0_4] : memref<1x256xf32, #tpu.memory_space<vmem>>, vector<1x256xf32>
    %4 = vector.broadcast %3 : vector<1x256xf32> to vector<2x256xf32>
    %5 = arith.addf %2, %4 : vector<2x256xf32>
    %cst_5 = arith.constant 0.000000e+00 : f32
    %6 = vector.broadcast %cst_5 : f32 to vector<2x256xf32>
    %7 = arith.maximumf %5, %6 : vector<2x256xf32>
    %c0_6 = arith.constant 0 : index
    %c0_7 = arith.constant 0 : index
    %8 = vector.load %arg4[%c0_6, %c0_7] : memref<2x256xf32, #tpu.memory_space<vmem>>, vector<2x256xf32>
    tpu.vector_store %arg4[%c0_6, %c0_7], %7 {strides = array<i32>} : memref<2x256xf32, #tpu.memory_space<vmem>>, vector<2x256xf32>,
    return
  }
  func.func @transform_0(%arg0: i32) -> (i32, i32) {
    %c0_i32 = arith.constant 0 : i32
    %c0_i32_0 = arith.constant 0 : i32
    %c0_i32_1 = arith.constant 0 : i32
    return %c0_i32, %c0_i32_0 : i32, i32
  }
  func.func @transform_1(%arg0: i32) -> (i32, i32) {
    %c0_i32 = arith.constant 0 : i32
    %c0_i32_0 = arith.constant 0 : i32
    return %c0_i32, %arg0 : i32, i32
  }
  func.func @transform_2(%arg0: i32) -> (i32, i32) {
    %c0_i32 = arith.constant 0 : i32
    %c0_i32_0 = arith.constant 0 : i32
    return %c0_i32, %arg0 : i32, i32
  }
  func.func @transform_3(%arg0: i32) -> (i32, i32) {
    %c0_i32 = arith.constant 0 : i32
    %c0_i32_0 = arith.constant 0 : i32
    return %c0_i32, %arg0 : i32, i32
  }
}

</mosaic_0001>

<llo_original>
// kernel: tpu_custom_call.1
$region0: #{tpu_custom_call.1}
  #allocation0 [shape = 'u32[]', space=smem, size = 0x4, offset = 0x4, fixed_abs, tag = 'smem constant byte address 0x4 - core index']
  #allocation1 [shape = 'u32[144,128]{1,0:T(1,128)}', space=vmem, size = 0x12000, scoped, tag = 'internal scratch']
  %s0 = inlined_call_operand.hbm [shape: bf16[2,32], index: 0, kind: input, shape index: {}]
  %s1 = inlined_call_operand.hbm [shape: bf16[32,256], index: 1, kind: input, shape index: {}]
  %s2 = inlined_call_operand.vmem [shape: f32[1,256], index: 2, kind: input, shape index: {}]
  %s3 = inlined_call_operand.hbm [shape: f32[2,256], index: 3, kind: output, shape index: {}]
  %s4 = sld [smem:[#allocation0]]
  $region30: #{tpu_custom_call.1} parent=0
    _
  %s6 = ssub.s32 1, %s4
  %s7 = scalar_select 0, %s6, %s4
  $region1: #{tpu_custom_call.1} parent=0
    #allocation2 [shape = 'u8[512]{0}', space=vmem, size = 0x400, scoped, tag = 'input window, operand 0, single buffered']
    #allocation3 [shape = 's32[1]{0}', space=sflag, size = 0x4, scoped, tag = 'scoped memory for tpu_custom_call.1']
    #allocation4 [shape = 's32[1]{0}', space=sflag, size = 0x4, scoped, tag = 'scoped memory for tpu_custom_call.1']
    #allocation5 [shape = 'u8[16384]{0}', space=vmem, size = 0x4000, scoped, tag = 'input window, operand 1, single buffered']
    #allocation6 [shape = 's32[1]{0}', space=sflag, size = 0x4, scoped, tag = 'scoped memory for tpu_custom_call.1']
    #allocation7 [shape = 'u8[2048]{0}', space=vmem, size = 0x800, scoped, tag = 'output window, operand 0, single buffered']
    %8 = vsyncpa [#allocation3], 0
    %9 = vsyncpa [#allocation6], 0
    %10 = vsyncpa [#allocation4], 0
    // Predicated region
    $region2: #{tpu_custom_call.1} parent=1 // pred_check
      _
    $region3: #{tpu_custom_call.1} parent=1 // pred_check_branch
      %12 = sbr.rel (0) target = $region5
    $region4: #{tpu_custom_call.1} parent=1 // pred_region
      %s14 = ssub.s32 16, 16
      %15 = vsyncadd [#allocation3], %s14
      %s17 = sshll.u32 [#allocation2], 4
      %s18 = int_to_ptr.vmem [resolvable:$true] %s17
      %20 = dma.hbm_to_vmem [thread:$0]  %s0, 16, %s18, [#allocation3]
    $region5: #{tpu_custom_call.1} parent=1 // pred_fallthru
      _
    // Predicated region
    $region6: #{tpu_custom_call.1} parent=1 // pred_check
      _
    $region7: #{tpu_custom_call.1} parent=1 // pred_check_branch
      %22 = sbr.rel (0) target = $region9
    $region8: #{tpu_custom_call.1} parent=1 // pred_region
      %s24 = ssub.s32 512, 512
      %25 = vsyncadd [#allocation6], %s24
      %s26 = sshll.u32 [#allocation5], 4
      %s27 = int_to_ptr.vmem [resolvable:$true] %s26
      %32 = dma.hbm_to_vmem [thread:$0]  %s1, 512, %s27, [#allocation6], 128, 128, 8
    $region9: #{tpu_custom_call.1} parent=1 // pred_fallthru
      _
    // Predicated region
    $region10: #{tpu_custom_call.1} parent=1 // pred_check
      _
    $region11: #{tpu_custom_call.1} parent=1 // pred_check_branch
      %34 = sbr.rel (0) target = $region13
    $region12: #{tpu_custom_call.1} parent=1 // pred_region
      _
    $region13: #{tpu_custom_call.1} parent=1 // pred_fallthru
      _
    // Predicated region
    $region14: #{tpu_custom_call.1} parent=1 // pred_check
      _
    $region15: #{tpu_custom_call.1} parent=1 // pred_check_branch
      %36 = sbr.rel (0) target = $region17
    $region16: #{tpu_custom_call.1} parent=1 // pred_region
      %37 = dma.done [#allocation3], 16
    $region17: #{tpu_custom_call.1} parent=1 // pred_fallthru
      _
    // Predicated region
    $region18: #{tpu_custom_call.1} parent=1 // pred_check
      _
    $region19: #{tpu_custom_call.1} parent=1 // pred_check_branch
      %39 = sbr.rel (0) target = $region21
    $region20: #{tpu_custom_call.1} parent=1 // pred_region
      %40 = dma.done [#allocation6], 512
    $region21: #{tpu_custom_call.1} parent=1 // pred_fallthru
      _
    %v42 = vld [vmem:[#allocation2] sm:$0x1]
    %v43 = vld [vmem:[#allocation5] sm:$0xff]
    %v44 = vld [vmem:[#allocation5 + $0x8] sm:$0xff]
    %v45 = vld [vmem:[#allocation5 + $0x10] sm:$0xff]
    %v46 = vld [vmem:[#allocation5 + $0x18] sm:$0xff]
    %v47 = vld [vmem:[%s2] sm:$0x3]
    %v49 = vlaneseq
    %v50 = vshrl.u32 %v49, 7
    %v51 = vsub.s32 0, %v50
    %v52 = vrot.slane %v47, %v51
    %v53 = vlaneseq
    %v54 = vshrl.u32 %v53, 7
    %v55 = vsub.s32 1, %v54
    %v56 = vrot.slane %v47, %v55
    %v63 = vunpack.c.l.b16 %v43
    %v64 = vunpack.c.h.b16 %v43
    %v65 = vunpack.c.l.b16 %v44
    %v66 = vunpack.c.h.b16 %v44
    %v67 = vunpack.c.l.b16 %v45
    %v68 = vunpack.c.h.b16 %v45
    %v69 = vunpack.c.l.b16 %v46
    %v70 = vunpack.c.h.b16 %v46
    %v71 = vpack.c.b16 %v65, %v63
    %v72 = vpack.c.b16 %v66, %v64
    %v73 = vpack.c.b16 %v69, %v67
    %v74 = vpack.c.b16 %v70, %v68
    %vm79 = vcmask 261120
    %v81 = vsel %vm79, %v42, 0
    %83 = vmatprep.subr.bf16.mxu0 0
    %84 = vmatpush1.bf16.msra.mxu0 0
    %85 = vmatprep.subr.bf16.mxu0 0
    %86 = vmatpush1.bf16.msra.mxu0 0
    %87 = vmatprep.subr.bf16.mxu0 0
    %88 = vmatpush1.bf16.msra.mxu0 0
    %89 = vmatprep.subr.bf16.mxu0 0
    %90 = vmatpush1.bf16.msra.mxu0 0
    %91 = vmatprep.subr.bf16.mxu0 0
    %92 = vmatpush1.bf16.msra.mxu0 0
    %93 = vmatprep.subr.bf16.mxu0 0
    %94 = vmatpush1.bf16.msra.mxu0 0
    %95 = vmatprep.subr.bf16.mxu0 %v74
    %96 = vmatpush1.bf16.msra.mxu0 %v73
    %97 = vmatprep.subr.bf16.mxu0 %v72
    %98 = vmatpush1.bf16.msra.mxu0 %v71
    %99 = vmatprep.subr.bf16.mxu0 0
    %100 = vmatpush2.bf16.msra.mxu0 0
    %101 = vmatprep.subr.bf16.mxu0 0
    %102 = vmatpush2.bf16.msra.mxu0 0
    %103 = vmatprep.subr.bf16.mxu0 0
    %104 = vmatpush2.bf16.msra.mxu0 0
    %105 = vmatprep.subr.bf16.mxu0 0
    %106 = vmatpush2.bf16.msra.mxu0 0
    %107 = vmatprep.subr.bf16.mxu0 0
    %108 = vmatpush2.bf16.msra.mxu0 0
    %109 = vmatprep.subr.bf16.mxu0 0
    %110 = vmatpush2.bf16.msra.mxu0 0
    %111 = vmatprep.subr.bf16.mxu0 0
    %112 = vmatpush2.bf16.msra.mxu0 0
    %113 = vmatprep.subr.bf16.mxu0 0
    %114 = vmatpush2.bf16.msra.mxu0 0
    %115 = vmatprep.mubr.bf16.mxu0 0
    %116 = vmatmul.mubr.bf16.gmra.mxu0 %v81
    %v117 = vpop.f32.mrf.mxu0
    %v118 = vadd.f32 %v52, %v117
    %v119 = vpop.f32.mrf.mxu0
    %v120 = vadd.f32 %v56, %v119
    %v121 = vpop.f32.mrf.mxu0
    %v122 = vpop.f32.mrf.mxu0
    %123 = vdwg.mxu0
    %v124 = vmax.f32 %v118, 0.0
    %v125 = vmax.f32 %v120, 0.0
    %v128 = vcombine.low %v124, %v125
    %v130 = vunpack.c.l.s4 1983009808
    %v131 = vunpack.c.0.s8 %v130
    %v132 = vlaneseq
    %v133 = vshrl.u32 %v132, 7
    %v134 = vsub.s32 %v131, %v133
    %v135 = vrot.slane %v128, %v134
    %137 = vst [vmem:[#allocation7] sm:$0xf] %v135
    // Predicated region
    $region22: #{tpu_custom_call.1} parent=1 // pred_check
      _
    $region23: #{tpu_custom_call.1} parent=1 // pred_check_branch
      %139 = sbr.rel (0) target = $region25
    $region24: #{tpu_custom_call.1} parent=1 // pred_region
      %s141 = ssub.s32 64, 64
      %142 = vsyncadd [#allocation4], %s141
      %s144 = sshll.u32 [#allocation7], 4
      %s145 = int_to_ptr.vmem [resolvable:$true] %s144
      %147 = dma.vmem_to_hbm [thread:$0]  %s145, 64, %s3, [#allocation4]
    $region25: #{tpu_custom_call.1} parent=1 // pred_fallthru
      _
    // Predicated region
    $region26: #{tpu_custom_call.1} parent=1 // pred_check
      _
    $region27: #{tpu_custom_call.1} parent=1 // pred_check_branch
      %149 = sbr.rel (0) target = $region29
    $region28: #{tpu_custom_call.1} parent=1 // pred_region
      %150 = dma.done [#allocation4], 64
    $region29: #{tpu_custom_call.1} parent=1 // pred_fallthru
      _
    %151 = vsyncpa [#allocation3], 1
    %152 = vsyncpa [#allocation6], 1
    %153 = vsyncpa [#allocation4], 1

</llo_original>
